<compile_context>
chip_gen: v7x
topology: tpu7x:2x2x1
jax: 0.10.0
libtpu: 0.0.40
codegen_flags: <defaults>
</compile_context>

<pallas_src>
import functools

import jax
import jax.numpy as jnp
from jax.experimental import pallas as pl
from jax.experimental.pallas import tpu as pltpu


def _round_up(n, m):
    return ((n + m - 1) // m) * m


# -----------------------------------------------------------------------------
# Fused multi-layer GRU kernel
# -----------------------------------------------------------------------------
def _stacked_gru_kernel(x_ref, h0_ref, w_rz_ref, w_in_ref, w_hn_ref,
                        b_rz_ref, b_in_ref, b_hn_ref, h1_ref, xh_ref,
                        *, num_layers, d_pad, h_pad):
    """All GRU layers in one kernel invocation.

    x_ref    : (B_pad, D_pad)                 f32   padded input
    h0_ref   : (L, B_pad, H_pad)              f32   padded initial hidden
    w_rz_ref : (L, D_pad + H_pad, 2*H_pad)    bf16  fused [W_ih_rz; W_hh_rz]
    w_in_ref : (L, D_pad, H_pad)              bf16  W_ih_n
    w_hn_ref : (L, H_pad, H_pad)              bf16  W_hh_n
    b_rz_ref : (L, 1, 2*H_pad)                f32   b_ih_rz + b_hh_rz
    b_in_ref : (L, 1, H_pad)                  f32
    b_hn_ref : (L, 1, H_pad)                  f32
    h1_ref   : (L, B_pad, H_pad)              f32   new hidden per layer (output)
    xh_ref   : (B_pad, D_pad + H_pad)         bf16  scratch: [x | h] concat
    """
    # Write the (bf16-cast) input once into the x-half of the concat buffer.
    xh_ref[:, :d_pad] = x_ref[...].astype(jnp.bfloat16)

    # Static unroll over layers: everything stays VMEM-resident.
    for i in range(num_layers):
        h = h0_ref[i]                                   # (B_pad, H_pad) f32
        xh_ref[:, d_pad:] = h.astype(jnp.bfloat16)
        xh = xh_ref[...]                                # (B_pad, D_pad+H_pad) bf16

        # r/z gates: single fused MXU matmul over the concatenated [x, h].
        rz = jnp.dot(xh, w_rz_ref[i],
                     preferred_element_type=jnp.float32) + b_rz_ref[i]
        # n gate: x and h contributions must stay separate (r gates h_n).
        i_n = jnp.dot(xh[:, :d_pad], w_in_ref[i],
                      preferred_element_type=jnp.float32) + b_in_ref[i]
        h_n = jnp.dot(xh[:, d_pad:], w_hn_ref[i],
                      preferred_element_type=jnp.float32) + b_hn_ref[i]

        # Lane-aligned gate slices (h_pad is a multiple of 128).
        r = jax.nn.sigmoid(rz[:, :h_pad])
        z = jax.nn.sigmoid(rz[:, h_pad:])
        n = jnp.tanh(i_n + r * h_n)
        h_new = (1.0 - z) * n + z * h                   # f32 gate math

        h1_ref[i] = h_new.astype(h1_ref.dtype)          # lane-dense store

        if i + 1 < num_layers:
            # Next layer's input = this layer's hidden (dropout == identity).
            # Weight rows beyond h_pad are zero-padded, so stale lanes in
            # xh_ref[:, h_pad:d_pad] contribute nothing.
            xh_ref[:, :h_pad] = h_new.astype(jnp.bfloat16)


# -----------------------------------------------------------------------------
# Parameters (PyTorch GRUCell layout + packed/padded kernel layout)
# -----------------------------------------------------------------------------
class StackedGRUParams:
    """nn.GRUCell-style parameters plus the padded bf16 kernel layout."""

    def __init__(self, key, num_layers, input_size, rnn_size):
        self.num_layers = num_layers
        self.input_size = input_size
        self.rnn_size = rnn_size
        self.layers = []  # raw f32 (w_ih_t, w_hh_t, b_ih, b_hh) per layer
        bound = 1.0 / (rnn_size ** 0.5)
        in_sz = input_size
        for _ in range(num_layers):
            key, k1, k2, k3, k4 = jax.random.split(key, 5)
            # PyTorch stores weight_ih as (3H, In); we keep the transpose (In, 3H).
            w_ih_t = jax.random.uniform(k1, (in_sz, 3 * rnn_size), jnp.float32,
                                        minval=-bound, maxval=bound)
            w_hh_t = jax.random.uniform(k2, (rnn_size, 3 * rnn_size), jnp.float32,
                                        minval=-bound, maxval=bound)
            b_ih = jax.random.uniform(k3, (1, 3 * rnn_size), jnp.float32,
                                      minval=-bound, maxval=bound)
            b_hh = jax.random.uniform(k4, (1, 3 * rnn_size), jnp.float32,
                                      minval=-bound, maxval=bound)
            self.layers.append((w_ih_t, w_hh_t, b_ih, b_hh))
            in_sz = rnn_size
        self._pack()

    def _pack(self):
        L, H = self.num_layers, self.rnn_size
        h_pad = _round_up(H, 128)
        d_pad = max(_round_up(self.input_size, 128), h_pad)
        self.h_pad, self.d_pad = h_pad, d_pad

        w_rz = jnp.zeros((L, d_pad + h_pad, 2 * h_pad), jnp.float32)
        w_in = jnp.zeros((L, d_pad, h_pad), jnp.float32)
        w_hn = jnp.zeros((L, h_pad, h_pad), jnp.float32)
        b_rz = jnp.zeros((L, 1, 2 * h_pad), jnp.float32)
        b_in = jnp.zeros((L, 1, h_pad), jnp.float32)
        b_hn = jnp.zeros((L, 1, h_pad), jnp.float32)

        for i, (w_ih_t, w_hh_t, b_ih, b_hh) in enumerate(self.layers):
            in_sz = w_ih_t.shape[0]
            # Fused r/z slab: x rows on top, h rows starting at d_pad.
            w_rz = w_rz.at[i, :in_sz, :H].set(w_ih_t[:, 0:H])
            w_rz = w_rz.at[i, :in_sz, h_pad:h_pad + H].set(w_ih_t[:, H:2 * H])
            w_rz = w_rz.at[i, d_pad:d_pad + H, :H].set(w_hh_t[:, 0:H])
            w_rz = w_rz.at[i, d_pad:d_pad + H, h_pad:h_pad + H].set(w_hh_t[:, H:2 * H])
            # n-gate slabs.
            w_in = w_in.at[i, :in_sz, :H].set(w_ih_t[:, 2 * H:])
            w_hn = w_hn.at[i, :H, :H].set(w_hh_t[:, 2 * H:])
            # Biases (r/z pre-summed; n-gate biases kept separate).
            b_rz = b_rz.at[i, :, :H].set(b_ih[:, 0:H] + b_hh[:, 0:H])
            b_rz = b_rz.at[i, :, h_pad:h_pad + H].set(b_ih[:, H:2 * H] + b_hh[:, H:2 * H])
            b_in = b_in.at[i, :, :H].set(b_ih[:, 2 * H:])
            b_hn = b_hn.at[i, :, :H].set(b_hh[:, 2 * H:])

        # Weights bf16 for the MXU; biases stay f32 (added post-accumulation).
        self.w_rz = w_rz.astype(jnp.bfloat16)
        self.w_in = w_in.astype(jnp.bfloat16)
        self.w_hn = w_hn.astype(jnp.bfloat16)
        self.b_rz, self.b_in, self.b_hn = b_rz, b_in, b_hn


# -----------------------------------------------------------------------------
# Forward wrapper (matches StackedGRU.forward semantics)
# -----------------------------------------------------------------------------
def stacked_gru_forward(params: StackedGRUParams, inp, hidden):
    """inp: (B, In) or (B, 1, In); hidden: (L, B, H) -> (output, h_1)."""
    triplet_dim = False
    if inp.ndim == 3:
        assert inp.shape[1] == 1
        triplet_dim = True
        inp = jnp.squeeze(inp, axis=1)

    B = inp.shape[0]
    L, H = params.num_layers, params.rnn_size
    d_pad, h_pad = params.d_pad, params.h_pad
    b_pad = _round_up(max(B, 8), 8)

    x_p = jnp.zeros((b_pad, d_pad), jnp.float32).at[:B, :inp.shape[1]].set(
        inp.astype(jnp.float32))
    h_p = jnp.zeros((L, b_pad, h_pad), jnp.float32).at[:, :B, :H].set(
        hidden.astype(jnp.float32))

    kernel = functools.partial(_stacked_gru_kernel,
                               num_layers=L, d_pad=d_pad, h_pad=h_pad)
    full = lambda arr: pl.BlockSpec(arr.shape, lambda: (0,) * arr.ndim)
    operands = (x_p, h_p, params.w_rz, params.w_in, params.w_hn,
                params.b_rz, params.b_in, params.b_hn)

    h1_p = pl.pallas_call(
        kernel,
        out_shape=jax.ShapeDtypeStruct((L, b_pad, h_pad), jnp.float32),
        in_specs=[full(a) for a in operands],
        out_specs=pl.BlockSpec((L, b_pad, h_pad), lambda: (0, 0, 0)),
        scratch_shapes=[pltpu.VMEM((b_pad, d_pad + h_pad), jnp.bfloat16)],
    )(*operands)

    h_1 = h1_p[:, :B, :H].astype(hidden.dtype)
    out = h_1[-1]
    if triplet_dim:
        out = out[:, None, :]
    return out, h_1


# -----------------------------------------------------------------------------
# Pure-JAX f32 reference (PyTorch GRUCell semantics)
# -----------------------------------------------------------------------------
def _reference_forward(params: StackedGRUParams, inp, hidden):
    if inp.ndim == 3:
        inp = jnp.squeeze(inp, axis=1)
        triplet = True
    else:
        triplet = False
    x = inp
    h_out = []
    H = params.rnn_size
    for i, (w_ih_t, w_hh_t, b_ih, b_hh) in enumerate(params.layers):
        h = hidden[i]
        gi = x @ w_ih_t + b_ih
        gh = h @ w_hh_t + b_hh
        r = jax.nn.sigmoid(gi[:, :H] + gh[:, :H])
        z = jax.nn.sigmoid(gi[:, H:2 * H] + gh[:, H:2 * H])
        n = jnp.tanh(gi[:, 2 * H:] + r * gh[:, 2 * H:])
        h_new = (1.0 - z) * n + z * h
        x = h_new
        h_out.append(h_new)
    h_out = jnp.stack(h_out)
    if triplet:
        x = x[:, None, :]
    return x, h_out


if __name__ == "__main__":
    num_layers = 2
    input_size = 16
    rnn_size = 32
    batch = 2

    key = jax.random.PRNGKey(0)
    kp, kx, kh = jax.random.split(key, 3)

    params = StackedGRUParams(kp, num_layers, input_size, rnn_size)

    # 3-D input path (B, 1, input_size), as used by the module's triplet branch.
    x = jax.random.normal(kx, (batch, 1, input_size), jnp.float32)
    hidden = jax.random.normal(kh, (num_layers, batch, rnn_size), jnp.float32)

    out, h_1 = stacked_gru_forward(params, x, hidden)
    out = jax.block_until_ready(out)
    h_1 = jax.block_until_ready(h_1)

    # Check against pure-JAX f32 reference (tolerance loosened for the bf16
    # MXU operands; gate math / accumulation is f32).
    out_ref, h_ref = _reference_forward(params, x, hidden)
    assert out.shape == (batch, 1, rnn_size)
    assert h_1.shape == (num_layers, batch, rnn_size)
    assert jnp.allclose(out, out_ref, atol=2e-2, rtol=2e-2), "output mismatch"
    assert jnp.allclose(h_1, h_ref, atol=2e-2, rtol=2e-2), "hidden mismatch"

    print("KERNEL_OK")
</pallas_src>

<mosaic_0001>
module attributes {stable_mosaic.version = 11 : i64} {
  func.func @_stacked_gru_kernel(%arg0: memref<8x128xf32, #tpu.memory_space<vmem>>, %arg1: memref<2x8x128xf32, #tpu.memory_space<vmem>>, %arg2: memref<2x256x256xbf16, #tpu.memory_space<vmem>>, %arg3: memref<2x128x128xbf16, #tpu.memory_space<vmem>>, %arg4: memref<2x128x128xbf16, #tpu.memory_space<vmem>>, %arg5: memref<2x1x256xf32, #tpu.memory_space<vmem>>, %arg6: memref<2x1x128xf32, #tpu.memory_space<vmem>>, %arg7: memref<2x1x128xf32, #tpu.memory_space<vmem>>, %arg8: memref<2x8x128xf32, #tpu.memory_space<vmem>>, %arg9: memref<8x256xbf16, #tpu.memory_space<vmem>>) attributes {dimension_semantics = [], scalar_prefetch = 0 : i64, scratch_operands = 1 : i64, tpu.core_type = #tpu.core_type<tc>} {
    %c0 = arith.constant 0 : index
    %c0_0 = arith.constant 0 : index
    %0 = vector.load %arg0[%c0, %c0_0] : memref<8x128xf32, #tpu.memory_space<vmem>>, vector<8x128xf32>
    %1 = arith.truncf %0 : vector<8x128xf32> to vector<8x128xbf16>
    %c0_1 = arith.constant 0 : index
    %c0_2 = arith.constant 0 : index
    %2 = vector.load %arg9[%c0_1, %c0_2] : memref<8x256xbf16, #tpu.memory_space<vmem>>, vector<8x128xbf16>
    tpu.vector_store %arg9[%c0_1, %c0_2], %1 {strides = array<i32>} : memref<8x256xbf16, #tpu.memory_space<vmem>>, vector<8x128xbf16>,
    %c0_3 = arith.constant 0 : index
    %c0_4 = arith.constant 0 : index
    %c0_5 = arith.constant 0 : index
    %3 = vector.load %arg1[%c0_3, %c0_4, %c0_5] : memref<2x8x128xf32, #tpu.memory_space<vmem>>, vector<1x8x128xf32>
    %4 = vector.shape_cast %3 : vector<1x8x128xf32> to vector<8x128xf32>
    %5 = arith.truncf %4 : vector<8x128xf32> to vector<8x128xbf16>
    %c0_6 = arith.constant 0 : index
    %c128 = arith.constant 128 : index
    %6 = vector.load %arg9[%c0_6, %c128] : memref<8x256xbf16, #tpu.memory_space<vmem>>, vector<8x128xbf16>
    tpu.vector_store %arg9[%c0_6, %c128], %5 {strides = array<i32>} : memref<8x256xbf16, #tpu.memory_space<vmem>>, vector<8x128xbf16>,
    %c0_7 = arith.constant 0 : index
    %c0_8 = arith.constant 0 : index
    %7 = vector.load %arg9[%c0_7, %c0_8] : memref<8x256xbf16, #tpu.memory_space<vmem>>, vector<8x256xbf16>
    %c0_9 = arith.constant 0 : index
    %c0_10 = arith.constant 0 : index
    %c0_11 = arith.constant 0 : index
    %8 = vector.load %arg2[%c0_9, %c0_10, %c0_11] : memref<2x256x256xbf16, #tpu.memory_space<vmem>>, vector<1x256x256xbf16>
    %9 = vector.shape_cast %8 : vector<1x256x256xbf16> to vector<256x256xbf16>
    %cst = arith.constant dense<0.000000e+00> : vector<8x256xf32>
    %10 = tpu.matmul %7, %9, %cst {dimension_numbers = #tpu.dot_dimension_numbers<[1], [0], [0], [1], [0, 0, 1, 1], [], []>} : vector<8x256xbf16>, vector<256x256xbf16>, vector<8x256xf32> -> vector<8x256xf32>
    %c0_12 = arith.constant 0 : index
    %c0_13 = arith.constant 0 : index
    %c0_14 = arith.constant 0 : index
    %11 = vector.load %arg5[%c0_12, %c0_13, %c0_14] : memref<2x1x256xf32, #tpu.memory_space<vmem>>, vector<1x1x256xf32>
    %12 = vector.shape_cast %11 : vector<1x1x256xf32> to vector<1x256xf32>
    %13 = vector.broadcast %12 : vector<1x256xf32> to vector<8x256xf32>
    %14 = arith.addf %10, %13 : vector<8x256xf32>
    %15 = vector.extract_strided_slice %7 {offsets = [0, 0], sizes = [8, 128], strides = [1, 1]} : vector<8x256xbf16> to vector<8x128xbf16>
    %c0_15 = arith.constant 0 : index
    %c0_16 = arith.constant 0 : index
    %c0_17 = arith.constant 0 : index
    %16 = vector.load %arg3[%c0_15, %c0_16, %c0_17] : memref<2x128x128xbf16, #tpu.memory_space<vmem>>, vector<1x128x128xbf16>
    %17 = vector.shape_cast %16 : vector<1x128x128xbf16> to vector<128x128xbf16>
    %cst_18 = arith.constant dense<0.000000e+00> : vector<8x128xf32>
    %18 = tpu.matmul %15, %17, %cst_18 {dimension_numbers = #tpu.dot_dimension_numbers<[1], [0], [0], [1], [0, 0, 1, 1], [], []>} : vector<8x128xbf16>, vector<128x128xbf16>, vector<8x128xf32> -> vector<8x128xf32>
    %c0_19 = arith.constant 0 : index
    %c0_20 = arith.constant 0 : index
    %c0_21 = arith.constant 0 : index
    %19 = vector.load %arg6[%c0_19, %c0_20, %c0_21] : memref<2x1x128xf32, #tpu.memory_space<vmem>>, vector<1x1x128xf32>
    %20 = vector.shape_cast %19 : vector<1x1x128xf32> to vector<1x128xf32>
    %21 = vector.broadcast %20 : vector<1x128xf32> to vector<8x128xf32>
    %22 = arith.addf %18, %21 : vector<8x128xf32>
    %23 = vector.extract_strided_slice %7 {offsets = [0, 128], sizes = [8, 128], strides = [1, 1]} : vector<8x256xbf16> to vector<8x128xbf16>
    %c0_22 = arith.constant 0 : index
    %c0_23 = arith.constant 0 : index
    %c0_24 = arith.constant 0 : index
    %24 = vector.load %arg4[%c0_22, %c0_23, %c0_24] : memref<2x128x128xbf16, #tpu.memory_space<vmem>>, vector<1x128x128xbf16>
    %25 = vector.shape_cast %24 : vector<1x128x128xbf16> to vector<128x128xbf16>
    %cst_25 = arith.constant dense<0.000000e+00> : vector<8x128xf32>
    %26 = tpu.matmul %23, %25, %cst_25 {dimension_numbers = #tpu.dot_dimension_numbers<[1], [0], [0], [1], [0, 0, 1, 1], [], []>} : vector<8x128xbf16>, vector<128x128xbf16>, vector<8x128xf32> -> vector<8x128xf32>
    %c0_26 = arith.constant 0 : index
    %c0_27 = arith.constant 0 : index
    %c0_28 = arith.constant 0 : index
    %27 = vector.load %arg7[%c0_26, %c0_27, %c0_28] : memref<2x1x128xf32, #tpu.memory_space<vmem>>, vector<1x1x128xf32>
    %28 = vector.shape_cast %27 : vector<1x1x128xf32> to vector<1x128xf32>
    %29 = vector.broadcast %28 : vector<1x128xf32> to vector<8x128xf32>
    %30 = arith.addf %26, %29 : vector<8x128xf32>
    %31 = vector.extract_strided_slice %14 {offsets = [0, 0], sizes = [8, 128], strides = [1, 1]} : vector<8x256xf32> to vector<8x128xf32>
    %32 = arith.negf %31 : vector<8x128xf32>
    %33 = math.exp %32 : vector<8x128xf32>
    %cst_29 = arith.constant 1.000000e+00 : f32
    %34 = vector.broadcast %cst_29 : f32 to vector<8x128xf32>
    %35 = arith.addf %34, %33 : vector<8x128xf32>
    %36 = arith.divf %34, %35 : vector<8x128xf32>
    %37 = vector.extract_strided_slice %14 {offsets = [0, 128], sizes = [8, 128], strides = [1, 1]} : vector<8x256xf32> to vector<8x128xf32>
    %38 = arith.negf %37 : vector<8x128xf32>
    %39 = math.exp %38 : vector<8x128xf32>
    %cst_30 = arith.constant 1.000000e+00 : f32
    %40 = vector.broadcast %cst_30 : f32 to vector<8x128xf32>
    %41 = arith.addf %40, %39 : vector<8x128xf32>
    %42 = arith.divf %40, %41 : vector<8x128xf32>
    %43 = arith.mulf %36, %30 : vector<8x128xf32>
    %44 = arith.addf %22, %43 : vector<8x128xf32>
    %45 = math.tanh %44 : vector<8x128xf32>
    %cst_31 = arith.constant 1.000000e+00 : f32
    %46 = vector.broadcast %cst_31 : f32 to vector<8x128xf32>
    %47 = arith.subf %46, %42 : vector<8x128xf32>
    %48 = arith.mulf %47, %45 : vector<8x128xf32>
    %49 = arith.mulf %42, %4 : vector<8x128xf32>
    %50 = arith.addf %48, %49 : vector<8x128xf32>
    %c0_32 = arith.constant 0 : index
    %c0_33 = arith.constant 0 : index
    %c0_34 = arith.constant 0 : index
    %51 = vector.load %arg8[%c0_32, %c0_33, %c0_34] : memref<2x8x128xf32, #tpu.memory_space<vmem>>, vector<1x8x128xf32>
    %52 = vector.shape_cast %51 : vector<1x8x128xf32> to vector<8x128xf32>
    %53 = vector.shape_cast %50 : vector<8x128xf32> to vector<1x8x128xf32>
    tpu.vector_store %arg8[%c0_32, %c0_33, %c0_34], %53 {strides = array<i32>} : memref<2x8x128xf32, #tpu.memory_space<vmem>>, vector<1x8x128xf32>,
    %54 = arith.truncf %50 : vector<8x128xf32> to vector<8x128xbf16>
    %c0_35 = arith.constant 0 : index
    %c0_36 = arith.constant 0 : index
    %55 = vector.load %arg9[%c0_35, %c0_36] : memref<8x256xbf16, #tpu.memory_space<vmem>>, vector<8x128xbf16>
    tpu.vector_store %arg9[%c0_35, %c0_36], %54 {strides = array<i32>} : memref<8x256xbf16, #tpu.memory_space<vmem>>, vector<8x128xbf16>,
    %c1 = arith.constant 1 : index
    %c0_37 = arith.constant 0 : index
    %c0_38 = arith.constant 0 : index
    %56 = vector.load %arg1[%c1, %c0_37, %c0_38] : memref<2x8x128xf32, #tpu.memory_space<vmem>>, vector<1x8x128xf32>
    %57 = vector.shape_cast %56 : vector<1x8x128xf32> to vector<8x128xf32>
    %58 = arith.truncf %57 : vector<8x128xf32> to vector<8x128xbf16>
    %c0_39 = arith.constant 0 : index
    %c128_40 = arith.constant 128 : index
    %59 = vector.load %arg9[%c0_39, %c128_40] : memref<8x256xbf16, #tpu.memory_space<vmem>>, vector<8x128xbf16>
    tpu.vector_store %arg9[%c0_39, %c128_40], %58 {strides = array<i32>} : memref<8x256xbf16, #tpu.memory_space<vmem>>, vector<8x128xbf16>,
    %c0_41 = arith.constant 0 : index
    %c0_42 = arith.constant 0 : index
    %60 = vector.load %arg9[%c0_41, %c0_42] : memref<8x256xbf16, #tpu.memory_space<vmem>>, vector<8x256xbf16>
    %c1_43 = arith.constant 1 : index
    %c0_44 = arith.constant 0 : index
    %c0_45 = arith.constant 0 : index
    %61 = vector.load %arg2[%c1_43, %c0_44, %c0_45] : memref<2x256x256xbf16, #tpu.memory_space<vmem>>, vector<1x256x256xbf16>
    %62 = vector.shape_cast %61 : vector<1x256x256xbf16> to vector<256x256xbf16>
    %cst_46 = arith.constant dense<0.000000e+00> : vector<8x256xf32>
    %63 = tpu.matmul %60, %62, %cst_46 {dimension_numbers = #tpu.dot_dimension_numbers<[1], [0], [0], [1], [0, 0, 1, 1], [], []>} : vector<8x256xbf16>, vector<256x256xbf16>, vector<8x256xf32> -> vector<8x256xf32>
    %c1_47 = arith.constant 1 : index
    %c0_48 = arith.constant 0 : index
    %c0_49 = arith.constant 0 : index
    %64 = vector.load %arg5[%c1_47, %c0_48, %c0_49] : memref<2x1x256xf32, #tpu.memory_space<vmem>>, vector<1x1x256xf32>
    %65 = vector.shape_cast %64 : vector<1x1x256xf32> to vector<1x256xf32>
    %66 = vector.broadcast %65 : vector<1x256xf32> to vector<8x256xf32>
    %67 = arith.addf %63, %66 : vector<8x256xf32>
    %68 = vector.extract_strided_slice %60 {offsets = [0, 0], sizes = [8, 128], strides = [1, 1]} : vector<8x256xbf16> to vector<8x128xbf16>
    %c1_50 = arith.constant 1 : index
    %c0_51 = arith.constant 0 : index
    %c0_52 = arith.constant 0 : index
    %69 = vector.load %arg3[%c1_50, %c0_51, %c0_52] : memref<2x128x128xbf16, #tpu.memory_space<vmem>>, vector<1x128x128xbf16>
    %70 = vector.shape_cast %69 : vector<1x128x128xbf16> to vector<128x128xbf16>
    %cst_53 = arith.constant dense<0.000000e+00> : vector<8x128xf32>
    %71 = tpu.matmul %68, %70, %cst_53 {dimension_numbers = #tpu.dot_dimension_numbers<[1], [0], [0], [1], [0, 0, 1, 1], [], []>} : vector<8x128xbf16>, vector<128x128xbf16>, vector<8x128xf32> -> vector<8x128xf32>
    %c1_54 = arith.constant 1 : index
    %c0_55 = arith.constant 0 : index
    %c0_56 = arith.constant 0 : index
    %72 = vector.load %arg6[%c1_54, %c0_55, %c0_56] : memref<2x1x128xf32, #tpu.memory_space<vmem>>, vector<1x1x128xf32>
    %73 = vector.shape_cast %72 : vector<1x1x128xf32> to vector<1x128xf32>
    %74 = vector.broadcast %73 : vector<1x128xf32> to vector<8x128xf32>
    %75 = arith.addf %71, %74 : vector<8x128xf32>
    %76 = vector.extract_strided_slice %60 {offsets = [0, 128], sizes = [8, 128], strides = [1, 1]} : vector<8x256xbf16> to vector<8x128xbf16>
    %c1_57 = arith.constant 1 : index
    %c0_58 = arith.constant 0 : index
    %c0_59 = arith.constant 0 : index
    %77 = vector.load %arg4[%c1_57, %c0_58, %c0_59] : memref<2x128x128xbf16, #tpu.memory_space<vmem>>, vector<1x128x128xbf16>
    %78 = vector.shape_cast %77 : vector<1x128x128xbf16> to vector<128x128xbf16>
    %cst_60 = arith.constant dense<0.000000e+00> : vector<8x128xf32>
    %79 = tpu.matmul %76, %78, %cst_60 {dimension_numbers = #tpu.dot_dimension_numbers<[1], [0], [0], [1], [0, 0, 1, 1], [], []>} : vector<8x128xbf16>, vector<128x128xbf16>, vector<8x128xf32> -> vector<8x128xf32>
    %c1_61 = arith.constant 1 : index
    %c0_62 = arith.constant 0 : index
    %c0_63 = arith.constant 0 : index
    %80 = vector.load %arg7[%c1_61, %c0_62, %c0_63] : memref<2x1x128xf32, #tpu.memory_space<vmem>>, vector<1x1x128xf32>
    %81 = vector.shape_cast %80 : vector<1x1x128xf32> to vector<1x128xf32>
    %82 = vector.broadcast %81 : vector<1x128xf32> to vector<8x128xf32>
    %83 = arith.addf %79, %82 : vector<8x128xf32>
    %84 = vector.extract_strided_slice %67 {offsets = [0, 0], sizes = [8, 128], strides = [1, 1]} : vector<8x256xf32> to vector<8x128xf32>
    %85 = arith.negf %84 : vector<8x128xf32>
    %86 = math.exp %85 : vector<8x128xf32>
    %cst_64 = arith.constant 1.000000e+00 : f32
    %87 = vector.broadcast %cst_64 : f32 to vector<8x128xf32>
    %88 = arith.addf %87, %86 : vector<8x128xf32>
    %89 = arith.divf %87, %88 : vector<8x128xf32>
    %90 = vector.extract_strided_slice %67 {offsets = [0, 128], sizes = [8, 128], strides = [1, 1]} : vector<8x256xf32> to vector<8x128xf32>
    %91 = arith.negf %90 : vector<8x128xf32>
    %92 = math.exp %91 : vector<8x128xf32>
    %cst_65 = arith.constant 1.000000e+00 : f32
    %93 = vector.broadcast %cst_65 : f32 to vector<8x128xf32>
    %94 = arith.addf %93, %92 : vector<8x128xf32>
    %95 = arith.divf %93, %94 : vector<8x128xf32>
    %96 = arith.mulf %89, %83 : vector<8x128xf32>
    %97 = arith.addf %75, %96 : vector<8x128xf32>
    %98 = math.tanh %97 : vector<8x128xf32>
    %cst_66 = arith.constant 1.000000e+00 : f32
    %99 = vector.broadcast %cst_66 : f32 to vector<8x128xf32>
    %100 = arith.subf %99, %95 : vector<8x128xf32>
    %101 = arith.mulf %100, %98 : vector<8x128xf32>
    %102 = arith.mulf %95, %57 : vector<8x128xf32>
    %103 = arith.addf %101, %102 : vector<8x128xf32>
    %c1_67 = arith.constant 1 : index
    %c0_68 = arith.constant 0 : index
    %c0_69 = arith.constant 0 : index
    %104 = vector.load %arg8[%c1_67, %c0_68, %c0_69] : memref<2x8x128xf32, #tpu.memory_space<vmem>>, vector<1x8x128xf32>
    %105 = vector.shape_cast %104 : vector<1x8x128xf32> to vector<8x128xf32>
    %106 = vector.shape_cast %103 : vector<8x128xf32> to vector<1x8x128xf32>
    tpu.vector_store %arg8[%c1_67, %c0_68, %c0_69], %106 {strides = array<i32>} : memref<2x8x128xf32, #tpu.memory_space<vmem>>, vector<1x8x128xf32>,
    return
  }
}

</mosaic_0001>

<llo_original>
// kernel: tpu_custom_call.1
$region0: #{tpu_custom_call.1}
  #allocation0 [shape = 'u32[]', space=smem, size = 0x4, offset = 0x4, fixed_abs, tag = 'smem constant byte address 0x4 - core index']
  #allocation1 [shape = 'u32[144,128]{1,0:T(1,128)}', space=vmem, size = 0x12000, scoped, tag = 'internal scratch']
  #allocation2 [shape = 'bf16[8,256]{1,0:T(8,128)(2,1)}', space=vmem, size = 0x1000, scoped, tag = 'scratch operand']
  %s0 = inlined_call_operand.hbm [shape: f32[8,128], index: 0, kind: input, shape index: {}]
  %s1 = inlined_call_operand.hbm [shape: f32[2,8,128], index: 1, kind: input, shape index: {}]
  %s2 = inlined_call_operand.hbm [shape: bf16[2,256,256], index: 2, kind: input, shape index: {}]
  %s3 = inlined_call_operand.hbm [shape: bf16[2,128,128], index: 3, kind: input, shape index: {}]
  %s4 = inlined_call_operand.hbm [shape: bf16[2,128,128], index: 4, kind: input, shape index: {}]
  %s5 = inlined_call_operand.vmem [shape: f32[2,1,256], index: 5, kind: input, shape index: {}]
  %s6 = inlined_call_operand.vmem [shape: f32[2,1,128], index: 6, kind: input, shape index: {}]
  %s7 = inlined_call_operand.vmem [shape: f32[2,1,128], index: 7, kind: input, shape index: {}]
  %s8 = inlined_call_operand.hbm [shape: f32[2,8,128], index: 8, kind: output, shape index: {}]
  %s9 = sld [smem:[#allocation0]]
  $region62: #{tpu_custom_call.1} parent=0
    _
  %s11 = ssub.s32 1, %s9
  %s12 = scalar_select 0, %s11, %s9
  $region1: #{tpu_custom_call.1} parent=0
    #allocation3 [shape = 'u8[4096]{0}', space=vmem, size = 0x1000, scoped, tag = 'input window, operand 0, single buffered']
    #allocation4 [shape = 's32[1]{0}', space=sflag, size = 0x4, scoped, tag = 'scoped memory for tpu_custom_call.1']
    #allocation5 [shape = 's32[1]{0}', space=sflag, size = 0x4, scoped, tag = 'scoped memory for tpu_custom_call.1']
    #allocation6 [shape = 'u8[8192]{0}', space=vmem, size = 0x2000, scoped, tag = 'input window, operand 1, single buffered']
    #allocation7 [shape = 's32[1]{0}', space=sflag, size = 0x4, scoped, tag = 'scoped memory for tpu_custom_call.1']
    #allocation8 [shape = 'u8[262144]{0}', space=vmem, size = 0x40000, scoped, tag = 'input window, operand 2, single buffered']
    #allocation9 [shape = 'u8[65536]{0}', space=vmem, size = 0x10000, scoped, tag = 'input window, operand 3, single buffered']
    #allocation10 [shape = 's32[1]{0}', space=sflag, size = 0x4, scoped, tag = 'scoped memory for tpu_custom_call.1']
    #allocation11 [shape = 'u8[65536]{0}', space=vmem, size = 0x10000, scoped, tag = 'input window, operand 4, single buffered']
    #allocation12 [shape = 'u8[8192]{0}', space=vmem, size = 0x2000, scoped, tag = 'output window, operand 0, single buffered']
    %13 = vsyncpa [#allocation4], 0
    %14 = vsyncpa [#allocation7], 0
    %15 = vsyncpa [#allocation10], 0
    %16 = vsyncpa [#allocation5], 0
    // Predicated region
    $region2: #{tpu_custom_call.1} parent=1 // pred_check
      _
    $region3: #{tpu_custom_call.1} parent=1 // pred_check_branch
      %18 = sbr.rel (0) target = $region5
    $region4: #{tpu_custom_call.1} parent=1 // pred_region
      %s20 = ssub.s32 128, 128
      %21 = vsyncadd [#allocation4], %s20
      %s23 = sshll.u32 [#allocation3], 4
      %s24 = int_to_ptr.vmem [resolvable:$true] %s23
      %26 = dma.hbm_to_vmem [thread:$0]  %s0, 128, %s24, [#allocation4]
    $region5: #{tpu_custom_call.1} parent=1 // pred_fallthru
      _
    // Predicated region
    $region6: #{tpu_custom_call.1} parent=1 // pred_check
      _
    $region7: #{tpu_custom_call.1} parent=1 // pred_check_branch
      %28 = sbr.rel (0) target = $region9
    $region8: #{tpu_custom_call.1} parent=1 // pred_region
      %s30 = ssub.s32 256, 256
      %31 = vsyncadd [#allocation7], %s30
      %s32 = sshll.u32 [#allocation6], 4
      %s33 = int_to_ptr.vmem [resolvable:$true] %s32
      %38 = dma.hbm_to_vmem [thread:$0]  %s1, 256, %s33, [#allocation7], 128, 128, 8
    $region9: #{tpu_custom_call.1} parent=1 // pred_fallthru
      _
    // Predicated region
    $region10: #{tpu_custom_call.1} parent=1 // pred_check
      _
    $region11: #{tpu_custom_call.1} parent=1 // pred_check_branch
      %40 = sbr.rel (0) target = $region13
    $region12: #{tpu_custom_call.1} parent=1 // pred_region
      %s42 = ssub.s32 8192, 8192
      %43 = vsyncadd [#allocation7], %s42
      %s44 = sshll.u32 [#allocation8], 4
      %s45 = int_to_ptr.vmem [resolvable:$true] %s44
      %50 = dma.hbm_to_vmem [thread:$0]  %s2, 8192, %s45, [#allocation7], 128, 128, 8
    $region13: #{tpu_custom_call.1} parent=1 // pred_fallthru
      _
    // Predicated region
    $region14: #{tpu_custom_call.1} parent=1 // pred_check
      _
    $region15: #{tpu_custom_call.1} parent=1 // pred_check_branch
      %52 = sbr.rel (0) target = $region17
    $region16: #{tpu_custom_call.1} parent=1 // pred_region
      %s54 = ssub.s32 2048, 2048
      %55 = vsyncadd [#allocation10], %s54
      %s56 = sshll.u32 [#allocation9], 4
      %s57 = int_to_ptr.vmem [resolvable:$true] %s56
      %62 = dma.hbm_to_vmem [thread:$0]  %s3, 2048, %s57, [#allocation10], 64, 64, 4
    $region17: #{tpu_custom_call.1} parent=1 // pred_fallthru
      _
    // Predicated region
    $region18: #{tpu_custom_call.1} parent=1 // pred_check
      _
    $region19: #{tpu_custom_call.1} parent=1 // pred_check_branch
      %64 = sbr.rel (0) target = $region21
    $region20: #{tpu_custom_call.1} parent=1 // pred_region
      %s66 = ssub.s32 2048, 2048
      %67 = vsyncadd [#allocation10], %s66
      %s68 = sshll.u32 [#allocation11], 4
      %s69 = int_to_ptr.vmem [resolvable:$true] %s68
      %74 = dma.hbm_to_vmem [thread:$0]  %s4, 2048, %s69, [#allocation10], 64, 64, 4
    $region21: #{tpu_custom_call.1} parent=1 // pred_fallthru
      _
    // Predicated region
    $region22: #{tpu_custom_call.1} parent=1 // pred_check
      _
    $region23: #{tpu_custom_call.1} parent=1 // pred_check_branch
      %76 = sbr.rel (0) target = $region25
    $region24: #{tpu_custom_call.1} parent=1 // pred_region
      _
    $region25: #{tpu_custom_call.1} parent=1 // pred_fallthru
      _
    // Predicated region
    $region26: #{tpu_custom_call.1} parent=1 // pred_check
      _
    $region27: #{tpu_custom_call.1} parent=1 // pred_check_branch
      %78 = sbr.rel (0) target = $region29
    $region28: #{tpu_custom_call.1} parent=1 // pred_region
      _
    $region29: #{tpu_custom_call.1} parent=1 // pred_fallthru
      _
    // Predicated region
    $region30: #{tpu_custom_call.1} parent=1 // pred_check
      _
    $region31: #{tpu_custom_call.1} parent=1 // pred_check_branch
      %80 = sbr.rel (0) target = $region33
    $region32: #{tpu_custom_call.1} parent=1 // pred_region
      _
    $region33: #{tpu_custom_call.1} parent=1 // pred_fallthru
      _
    // Predicated region
    $region34: #{tpu_custom_call.1} parent=1 // pred_check
      _
    $region35: #{tpu_custom_call.1} parent=1 // pred_check_branch
      %82 = sbr.rel (0) target = $region37
    $region36: #{tpu_custom_call.1} parent=1 // pred_region
      %83 = dma.done [#allocation4], 128
    $region37: #{tpu_custom_call.1} parent=1 // pred_fallthru
      _
    // Predicated region
    $region38: #{tpu_custom_call.1} parent=1 // pred_check
      _
    $region39: #{tpu_custom_call.1} parent=1 // pred_check_branch
      %85 = sbr.rel (0) target = $region41
    $region40: #{tpu_custom_call.1} parent=1 // pred_region
      %86 = dma.done [#allocation7], 256
    $region41: #{tpu_custom_call.1} parent=1 // pred_fallthru
      _
    // Predicated region
    $region42: #{tpu_custom_call.1} parent=1 // pred_check
      _
    $region43: #{tpu_custom_call.1} parent=1 // pred_check_branch
      %88 = sbr.rel (0) target = $region45
    $region44: #{tpu_custom_call.1} parent=1 // pred_region
      %89 = dma.done [#allocation7], 8192
    $region45: #{tpu_custom_call.1} parent=1 // pred_fallthru
      _
    // Predicated region
    $region46: #{tpu_custom_call.1} parent=1 // pred_check
      _
    $region47: #{tpu_custom_call.1} parent=1 // pred_check_branch
      %91 = sbr.rel (0) target = $region49
    $region48: #{tpu_custom_call.1} parent=1 // pred_region
      %92 = dma.done [#allocation10], 2048
    $region49: #{tpu_custom_call.1} parent=1 // pred_fallthru
      _
    // Predicated region
    $region50: #{tpu_custom_call.1} parent=1 // pred_check
      _
    $region51: #{tpu_custom_call.1} parent=1 // pred_check_branch
      %94 = sbr.rel (0) target = $region53
    $region52: #{tpu_custom_call.1} parent=1 // pred_region
      %95 = dma.done [#allocation10], 2048
    $region53: #{tpu_custom_call.1} parent=1 // pred_fallthru
      _
    %v97 = vld [vmem:[#allocation3] sm:$0xff]
    %v98 = vpack.c.bf16 %v97, %v97
    %99 = vst [vmem:[#allocation2] sm:$0xf] %v98
    %v100 = vld [vmem:[#allocation6] sm:$0xff]
    %v101 = vpack.c.bf16 %v100, %v100
    %102 = vst [vmem:[#allocation2 + $0x4] sm:$0xf] %v101
    %v103 = vld [vmem:[#allocation2] sm:$0xff]
    %v104 = vld [vmem:[#allocation8] sm:$0xff]
    %v105 = vld [vmem:[#allocation8 + $0x8] sm:$0xff]
    %v106 = vld [vmem:[#allocation8 + $0x10] sm:$0xff]
    %v107 = vld [vmem:[#allocation8 + $0x18] sm:$0xff]
    %v108 = vld [vmem:[#allocation8 + $0x20] sm:$0xff]
    %v109 = vld [vmem:[#allocation8 + $0x28] sm:$0xff]
    %v110 = vld [vmem:[#allocation8 + $0x30] sm:$0xff]
    %v111 = vld [vmem:[#allocation8 + $0x38] sm:$0xff]
    %v112 = vld [vmem:[#allocation8 + $0x40] sm:$0xff]
    %v113 = vld [vmem:[#allocation8 + $0x48] sm:$0xff]
    %v114 = vld [vmem:[#allocation8 + $0x50] sm:$0xff]
    %v115 = vld [vmem:[#allocation8 + $0x58] sm:$0xff]
    %v116 = vld [vmem:[#allocation8 + $0x60] sm:$0xff]
    %v117 = vld [vmem:[#allocation8 + $0x68] sm:$0xff]
    %v118 = vld [vmem:[#allocation8 + $0x70] sm:$0xff]
    %v119 = vld [vmem:[#allocation8 + $0x78] sm:$0xff]
    %v120 = vld [vmem:[#allocation8 + $0x80] sm:$0xff]
    %v121 = vld [vmem:[#allocation8 + $0x88] sm:$0xff]
    %v122 = vld [vmem:[#allocation8 + $0x90] sm:$0xff]
    %v123 = vld [vmem:[#allocation8 + $0x98] sm:$0xff]
    %v124 = vld [vmem:[#allocation8 + $0xa0] sm:$0xff]
    %v125 = vld [vmem:[#allocation8 + $0xa8] sm:$0xff]
    %v126 = vld [vmem:[#allocation8 + $0xb0] sm:$0xff]
    %v127 = vld [vmem:[#allocation8 + $0xb8] sm:$0xff]
    %v128 = vld [vmem:[#allocation8 + $0xc0] sm:$0xff]
    %v129 = vld [vmem:[#allocation8 + $0xc8] sm:$0xff]
    %v130 = vld [vmem:[#allocation8 + $0xd0] sm:$0xff]
    %v131 = vld [vmem:[#allocation8 + $0xd8] sm:$0xff]
    %v132 = vld [vmem:[#allocation8 + $0xe0] sm:$0xff]
    %v133 = vld [vmem:[#allocation8 + $0xe8] sm:$0xff]
    %v134 = vld [vmem:[#allocation8 + $0xf0] sm:$0xff]
    %v135 = vld [vmem:[#allocation8 + $0xf8] sm:$0xff]
    %v136 = vld [vmem:[%s5] sm:$0x3]
    %v138 = vlaneseq
    %v139 = vshrl.u32 %v138, 7
    %v140 = vsub.s32 0, %v139
    %v141 = vrot.slane %v136, %v140
    %v142 = vlaneseq
    %v143 = vshrl.u32 %v142, 7
    %v144 = vsub.s32 1, %v143
    %v145 = vrot.slane %v136, %v144
    %v149 = vunpack.c.l.b16 %v103
    %v150 = vunpack.c.h.b16 %v103
    %v151 = vpack.c.b16 %v149, %v149
    %v152 = vpack.c.b16 %v150, %v150
    %v187 = vunpack.c.l.b16 %v104
    %v188 = vunpack.c.h.b16 %v104
    %v189 = vunpack.c.l.b16 %v105
    %v190 = vunpack.c.h.b16 %v105
    %v191 = vunpack.c.l.b16 %v106
    %v192 = vunpack.c.h.b16 %v106
    %v193 = vunpack.c.l.b16 %v107
    %v194 = vunpack.c.h.b16 %v107
    %v195 = vunpack.c.l.b16 %v108
    %v196 = vunpack.c.h.b16 %v108
    %v197 = vunpack.c.l.b16 %v109
    %v198 = vunpack.c.h.b16 %v109
    %v199 = vunpack.c.l.b16 %v110
    %v200 = vunpack.c.h.b16 %v110
    %v201 = vunpack.c.l.b16 %v111
    %v202 = vunpack.c.h.b16 %v111
    %v203 = vunpack.c.l.b16 %v112
    %v204 = vunpack.c.h.b16 %v112
    %v205 = vunpack.c.l.b16 %v113
    %v206 = vunpack.c.h.b16 %v113
    %v207 = vunpack.c.l.b16 %v114
    %v208 = vunpack.c.h.b16 %v114
    %v209 = vunpack.c.l.b16 %v115
    %v210 = vunpack.c.h.b16 %v115
    %v211 = vunpack.c.l.b16 %v116
    %v212 = vunpack.c.h.b16 %v116
    %v213 = vunpack.c.l.b16 %v117
    %v214 = vunpack.c.h.b16 %v117
    %v215 = vunpack.c.l.b16 %v118
    %v216 = vunpack.c.h.b16 %v118
    %v217 = vunpack.c.l.b16 %v119
    %v218 = vunpack.c.h.b16 %v119
    %v219 = vunpack.c.l.b16 %v120
    %v220 = vunpack.c.h.b16 %v120
    %v221 = vunpack.c.l.b16 %v121
    %v222 = vunpack.c.h.b16 %v121
    %v223 = vunpack.c.l.b16 %v122
    %v224 = vunpack.c.h.b16 %v122
    %v225 = vunpack.c.l.b16 %v123
    %v226 = vunpack.c.h.b16 %v123
    %v227 = vunpack.c.l.b16 %v124
    %v228 = vunpack.c.h.b16 %v124
    %v229 = vunpack.c.l.b16 %v125
    %v230 = vunpack.c.h.b16 %v125
    %v231 = vunpack.c.l.b16 %v126
    %v232 = vunpack.c.h.b16 %v126
    %v233 = vunpack.c.l.b16 %v127
    %v234 = vunpack.c.h.b16 %v127
    %v235 = vunpack.c.l.b16 %v128
    %v236 = vunpack.c.h.b16 %v128
    %v237 = vunpack.c.l.b16 %v129
    %v238 = vunpack.c.h.b16 %v129
    %v239 = vunpack.c.l.b16 %v130
    %v240 = vunpack.c.h.b16 %v130
    %v241 = vunpack.c.l.b16 %v131
    %v242 = vunpack.c.h.b16 %v131
    %v243 = vunpack.c.l.b16 %v132
    %v244 = vunpack.c.h.b16 %v132
    %v245 = vunpack.c.l.b16 %v133
    %v246 = vunpack.c.h.b16 %v133
    %v247 = vunpack.c.l.b16 %v134
    %v248 = vunpack.c.h.b16 %v134
    %v249 = vunpack.c.l.b16 %v135
    %v250 = vunpack.c.h.b16 %v135
    %v251 = vpack.c.b16 %v189, %v187
    %v252 = vpack.c.b16 %v190, %v188
    %v253 = vpack.c.b16 %v193, %v191
    %v254 = vpack.c.b16 %v194, %v192
    %v255 = vpack.c.b16 %v197, %v195
    %v256 = vpack.c.b16 %v198, %v196
    %v257 = vpack.c.b16 %v201, %v199
    %v258 = vpack.c.b16 %v202, %v200
    %v259 = vpack.c.b16 %v205, %v203
    %v260 = vpack.c.b16 %v206, %v204
    %v261 = vpack.c.b16 %v209, %v207
    %v262 = vpack.c.b16 %v210, %v208
    %v263 = vpack.c.b16 %v213, %v211
    %v264 = vpack.c.b16 %v214, %v212
    %v265 = vpack.c.b16 %v217, %v215
    %v266 = vpack.c.b16 %v218, %v216
    %v267 = vpack.c.b16 %v221, %v219
    %v268 = vpack.c.b16 %v222, %v220
    %v269 = vpack.c.b16 %v225, %v223
    %v270 = vpack.c.b16 %v226, %v224
    %v271 = vpack.c.b16 %v229, %v227
    %v272 = vpack.c.b16 %v230, %v228
    %v273 = vpack.c.b16 %v233, %v231
    %v274 = vpack.c.b16 %v234, %v232
    %v275 = vpack.c.b16 %v237, %v235
    %v276 = vpack.c.b16 %v238, %v236
    %v277 = vpack.c.b16 %v241, %v239
    %v278 = vpack.c.b16 %v242, %v240
    %v279 = vpack.c.b16 %v245, %v243
    %v280 = vpack.c.b16 %v246, %v244
    %v281 = vpack.c.b16 %v249, %v247
    %v282 = vpack.c.b16 %v250, %v248
    %315 = vmatprep.subr.bf16.mxu0 %v252
    %316 = vmatpush1.bf16.msra.mxu0 %v251
    %317 = vmatprep.subr.bf16.mxu0 %v254
    %318 = vmatpush1.bf16.msra.mxu0 %v253
    %319 = vmatprep.subr.bf16.mxu0 %v256
    %320 = vmatpush1.bf16.msra.mxu0 %v255
    %321 = vmatprep.subr.bf16.mxu0 %v258
    %322 = vmatpush1.bf16.msra.mxu0 %v257
    %323 = vmatprep.subr.bf16.mxu0 %v260
    %324 = vmatpush1.bf16.msra.mxu0 %v259
    %325 = vmatprep.subr.bf16.mxu0 %v262
    %326 = vmatpush1.bf16.msra.mxu0 %v261
    %327 = vmatprep.subr.bf16.mxu0 %v264
    %328 = vmatpush1.bf16.msra.mxu0 %v263
    %329 = vmatprep.subr.bf16.mxu0 %v266
    %330 = vmatpush1.bf16.msra.mxu0 %v265
    %331 = vmatprep.subr.bf16.mxu0 %v268
    %332 = vmatpush1.bf16.msra.mxu0 %v267
    %333 = vmatprep.subr.bf16.mxu0 %v270
    %334 = vmatpush1.bf16.msra.mxu0 %v269
    %335 = vmatprep.subr.bf16.mxu0 %v272
    %336 = vmatpush1.bf16.msra.mxu0 %v271
    %337 = vmatprep.subr.bf16.mxu0 %v274
    %338 = vmatpush1.bf16.msra.mxu0 %v273
    %339 = vmatprep.subr.bf16.mxu0 %v276
    %340 = vmatpush1.bf16.msra.mxu0 %v275
    %341 = vmatprep.subr.bf16.mxu0 %v278
    %342 = vmatpush1.bf16.msra.mxu0 %v277
    %343 = vmatprep.subr.bf16.mxu0 %v280
    %344 = vmatpush1.bf16.msra.mxu0 %v279
    %345 = vmatprep.subr.bf16.mxu0 %v282
    %346 = vmatpush1.bf16.msra.mxu0 %v281
    %347 = vmatprep.mubr.bf16.mxu0 %v152
    %348 = vmatmul.mubr.bf16.gmra.mrb[0].mxu0 %v151
    %v349 = vpop.f32.mrb[0].mxu0
    %v350 = vadd.f32 %v141, %v349
    %v351 = vpop.f32.mrb[0].mxu0
    %v352 = vadd.f32 %v145, %v351
    %v353 = vpop.f32.mrb[0].mxu0
    %v354 = vpop.f32.mrb[0].mxu0
    %355 = vdwg.mxu0
    %v356 = vld [vmem:[#allocation9] sm:$0xf]
    %v357 = vld [vmem:[#allocation9 + $0x4] sm:$0xf]
    %v358 = vld [vmem:[#allocation9 + $0x8] sm:$0xf]
    %v359 = vld [vmem:[#allocation9 + $0xc] sm:$0xf]
    %v360 = vld [vmem:[#allocation9 + $0x10] sm:$0xf]
    %v361 = vld [vmem:[#allocation9 + $0x14] sm:$0xf]
    %v362 = vld [vmem:[#allocation9 + $0x18] sm:$0xf]
    %v363 = vld [vmem:[#allocation9 + $0x1c] sm:$0xf]
    %v364 = vld [vmem:[#allocation9 + $0x20] sm:$0xf]
    %v365 = vld [vmem:[#allocation9 + $0x24] sm:$0xf]
    %v366 = vld [vmem:[#allocation9 + $0x28] sm:$0xf]
    %v367 = vld [vmem:[#allocation9 + $0x2c] sm:$0xf]
    %v368 = vld [vmem:[#allocation9 + $0x30] sm:$0xf]
    %v369 = vld [vmem:[#allocation9 + $0x34] sm:$0xf]
    %v370 = vld [vmem:[#allocation9 + $0x38] sm:$0xf]
    %v371 = vld [vmem:[#allocation9 + $0x3c] sm:$0xf]
    %v372 = vld [vmem:[%s6] sm:$0x1]
    %v374 = vlaneseq
    %v375 = vshrl.u32 %v374, 7
    %v376 = vsub.s32 0, %v375
    %v377 = vrot.slane %v372, %v376
    %v395 = vunpack.c.l.b16 %v356
    %v396 = vunpack.c.l.b16 %v357
    %v397 = vunpack.c.l.b16 %v358
    %v398 = vunpack.c.l.b16 %v359
    %v399 = vunpack.c.l.b16 %v360
    %v400 = vunpack.c.l.b16 %v361
    %v401 = vunpack.c.l.b16 %v362
    %v402 = vunpack.c.l.b16 %v363
    %v403 = vunpack.c.l.b16 %v364
    %v404 = vunpack.c.l.b16 %v365
    %v405 = vunpack.c.l.b16 %v366
    %v406 = vunpack.c.l.b16 %v367
    %v407 = vunpack.c.l.b16 %v368
    %v408 = vunpack.c.l.b16 %v369
    %v409 = vunpack.c.l.b16 %v370
    %v410 = vunpack.c.l.b16 %v371
    %v411 = vpack.c.b16 %v396, %v395
    %v412 = vpack.c.b16 %v398, %v397
    %v413 = vpack.c.b16 %v400, %v399
    %v414 = vpack.c.b16 %v402, %v401
    %v415 = vpack.c.b16 %v404, %v403
    %v416 = vpack.c.b16 %v406, %v405
    %v417 = vpack.c.b16 %v408, %v407
    %v418 = vpack.c.b16 %v410, %v409
    %427 = vmatprep.subr.bf16.mxu0 0
    %428 = vmatpush1.bf16.msra.mxu0 %v411
    %429 = vmatprep.subr.bf16.mxu0 0
    %430 = vmatpush1.bf16.msra.mxu0 %v412
    %431 = vmatprep.subr.bf16.mxu0 0
    %432 = vmatpush1.bf16.msra.mxu0 %v413
    %433 = vmatprep.subr.bf16.mxu0 0
    %434 = vmatpush1.bf16.msra.mxu0 %v414
    %435 = vmatprep.subr.bf16.mxu0 0
    %436 = vmatpush1.bf16.msra.mxu0 %v415
    %437 = vmatprep.subr.bf16.mxu0 0
    %438 = vmatpush1.bf16.msra.mxu0 %v416
    %439 = vmatprep.subr.bf16.mxu0 0
    %440 = vmatpush1.bf16.msra.mxu0 %v417
    %441 = vmatprep.subr.bf16.mxu0 0
    %442 = vmatpush1.bf16.msra.mxu0 %v418
    %443 = vmatprep.subr.bf16.mxu0 0
    %444 = vmatpush1.bf16.msra.mxu0 0
    %445 = vmatprep.subr.bf16.mxu0 0
    %446 = vmatpush1.bf16.msra.mxu0 0
    %447 = vmatprep.subr.bf16.mxu0 0
    %448 = vmatpush1.bf16.msra.mxu0 0
    %449 = vmatprep.subr.bf16.mxu0 0
    %450 = vmatpush1.bf16.msra.mxu0 0
    %451 = vmatprep.subr.bf16.mxu0 0
    %452 = vmatpush1.bf16.msra.mxu0 0
    %453 = vmatprep.subr.bf16.mxu0 0
    %454 = vmatpush1.bf16.msra.mxu0 0
    %455 = vmatprep.subr.bf16.mxu0 0
    %456 = vmatpush1.bf16.msra.mxu0 0
    %457 = vmatprep.subr.bf16.mxu0 0
    %458 = vmatpush1.bf16.msra.mxu0 0
    %459 = vmatprep.mubr.bf16.mxu0 0
    %460 = vmatmul.mubr.bf16.gmra.mrb[0].mxu0 %v103
    %v461 = vpop.f32.mrb[0].mxu0
    %v462 = vadd.f32 %v377, %v461
    %v463 = vpop.f32.mrb[0].mxu0
    %v464 = vpop.f32.mrb[0].mxu0
    %v465 = vpop.f32.mrb[0].mxu0
    %466 = vdwg.mxu0
    %v467 = vld [vmem:[#allocation11] sm:$0xf]
    %v468 = vld [vmem:[#allocation11 + $0x4] sm:$0xf]
    %v469 = vld [vmem:[#allocation11 + $0x8] sm:$0xf]
    %v470 = vld [vmem:[#allocation11 + $0xc] sm:$0xf]
    %v471 = vld [vmem:[#allocation11 + $0x10] sm:$0xf]
    %v472 = vld [vmem:[#allocation11 + $0x14] sm:$0xf]
    %v473 = vld [vmem:[#allocation11 + $0x18] sm:$0xf]
    %v474 = vld [vmem:[#allocation11 + $0x1c] sm:$0xf]
    %v475 = vld [vmem:[#allocation11 + $0x20] sm:$0xf]
    %v476 = vld [vmem:[#allocation11 + $0x24] sm:$0xf]
    %v477 = vld [vmem:[#allocation11 + $0x28] sm:$0xf]
    %v478 = vld [vmem:[#allocation11 + $0x2c] sm:$0xf]
    %v479 = vld [vmem:[#allocation11 + $0x30] sm:$0xf]
    %v480 = vld [vmem:[#allocation11 + $0x34] sm:$0xf]
    %v481 = vld [vmem:[#allocation11 + $0x38] sm:$0xf]
    %v482 = vld [vmem:[#allocation11 + $0x3c] sm:$0xf]
    %v483 = vld [vmem:[%s7] sm:$0x1]
    %v485 = vlaneseq
    %v486 = vshrl.u32 %v485, 7
    %v487 = vsub.s32 0, %v486
    %v488 = vrot.slane %v483, %v487
    %v506 = vunpack.c.l.b16 %v467
    %v507 = vunpack.c.l.b16 %v468
    %v508 = vunpack.c.l.b16 %v469
    %v509 = vunpack.c.l.b16 %v470
    %v510 = vunpack.c.l.b16 %v471
    %v511 = vunpack.c.l.b16 %v472
    %v512 = vunpack.c.l.b16 %v473
    %v513 = vunpack.c.l.b16 %v474
    %v514 = vunpack.c.l.b16 %v475
    %v515 = vunpack.c.l.b16 %v476
    %v516 = vunpack.c.l.b16 %v477
    %v517 = vunpack.c.l.b16 %v478
    %v518 = vunpack.c.l.b16 %v479
    %v519 = vunpack.c.l.b16 %v480
    %v520 = vunpack.c.l.b16 %v481
    %v521 = vunpack.c.l.b16 %v482
    %v522 = vpack.c.b16 %v507, %v506
    %v523 = vpack.c.b16 %v509, %v508
    %v524 = vpack.c.b16 %v511, %v510
    %v525 = vpack.c.b16 %v513, %v512
    %v526 = vpack.c.b16 %v515, %v514
    %v527 = vpack.c.b16 %v517, %v516
    %v528 = vpack.c.b16 %v519, %v518
    %v529 = vpack.c.b16 %v521, %v520
    %538 = vmatprep.subr.bf16.mxu0 0
    %539 = vmatpush1.bf16.msra.mxu0 %v522
    %540 = vmatprep.subr.bf16.mxu0 0
    %541 = vmatpush1.bf16.msra.mxu0 %v523
    %542 = vmatprep.subr.bf16.mxu0 0
    %543 = vmatpush1.bf16.msra.mxu0 %v524
    %544 = vmatprep.subr.bf16.mxu0 0
    %545 = vmatpush1.bf16.msra.mxu0 %v525
    %546 = vmatprep.subr.bf16.mxu0 0
    %547 = vmatpush1.bf16.msra.mxu0 %v526
    %548 = vmatprep.subr.bf16.mxu0 0
    %549 = vmatpush1.bf16.msra.mxu0 %v527
    %550 = vmatprep.subr.bf16.mxu0 0
    %551 = vmatpush1.bf16.msra.mxu0 %v528
    %552 = vmatprep.subr.bf16.mxu0 0
    %553 = vmatpush1.bf16.msra.mxu0 %v529
    %554 = vmatprep.subr.bf16.mxu0 0
    %555 = vmatpush1.bf16.msra.mxu0 0
    %556 = vmatprep.subr.bf16.mxu0 0
    %557 = vmatpush1.bf16.msra.mxu0 0
    %558 = vmatprep.subr.bf16.mxu0 0
    %559 = vmatpush1.bf16.msra.mxu0 0
    %560 = vmatprep.subr.bf16.mxu0 0
    %561 = vmatpush1.bf16.msra.mxu0 0
    %562 = vmatprep.subr.bf16.mxu0 0
    %563 = vmatpush1.bf16.msra.mxu0 0
    %564 = vmatprep.subr.bf16.mxu0 0
    %565 = vmatpush1.bf16.msra.mxu0 0
    %566 = vmatprep.subr.bf16.mxu0 0
    %567 = vmatpush1.bf16.msra.mxu0 0
    %568 = vmatprep.subr.bf16.mxu0 0
    %569 = vmatpush1.bf16.msra.mxu0 0
    %570 = vmatprep.mubr.bf16.mxu0 0
    %571 = vmatmul.mubr.bf16.gmra.mrb[0].mxu0 %v152
    %v572 = vpop.f32.mrb[0].mxu0
    %v573 = vadd.f32 %v488, %v572
    %v574 = vpop.f32.mrb[0].mxu0
    %v575 = vpop.f32.mrb[0].mxu0
    %v576 = vpop.f32.mrb[0].mxu0
    %577 = vdwg.mxu0
    %v578 = vxor.u32 %v350, 2147483648
    %v579 = vmul.f32 %v578, 1.442695
    %v580 = vpow.pop %v579
    %v581 = vadd.f32 %v580, 1.0
    %v582 = vrcp.pop %v581
    %v583 = vmul.f32 1.0, %v582
    %v584 = vxor.u32 %v352, 2147483648
    %v585 = vmul.f32 %v584, 1.442695
    %v586 = vpow.pop %v585
    %v587 = vadd.f32 %v586, 1.0
    %v588 = vrcp.pop %v587
    %v589 = vmul.f32 1.0, %v588
    %v590 = vmul.f32 %v583, %v573
    %v591 = vadd.f32 %v462, %v590
    %v592 = vtanh.pop %v591
    %v593 = vsub.f32 1.0, %v589
    %v594 = vmul.f32 %v593, %v592
    %v595 = vmul.f32 %v589, %v100
    %v596 = vadd.f32 %v594, %v595
    %597 = vst [vmem:[#allocation12] sm:$0xff] %v596
    %v598 = vpack.c.bf16 %v596, %v596
    %599 = vst [vmem:[#allocation2] sm:$0xf] %v598
    %s600 = scalar_lea.vmem [#allocation6], 8
    %v601 = vld [vmem:[%s600] sm:$0xff]
    %v602 = vpack.c.bf16 %v601, %v601
    %603 = vst [vmem:[#allocation2 + $0x4] sm:$0xf] %v602
    %v604 = vld [vmem:[#allocation2] sm:$0xff]
    %s605 = scalar_lea.vmem [#allocation8], 256
    %v606 = vld [vmem:[%s605] sm:$0xff]
    %v607 = vld [vmem:[%s605 + $0x8] sm:$0xff]
    %v608 = vld [vmem:[%s605 + $0x10] sm:$0xff]
    %v609 = vld [vmem:[%s605 + $0x18] sm:$0xff]
    %v610 = vld [vmem:[%s605 + $0x20] sm:$0xff]
    %v611 = vld [vmem:[%s605 + $0x28] sm:$0xff]
    %v612 = vld [vmem:[%s605 + $0x30] sm:$0xff]
    %v613 = vld [vmem:[%s605 + $0x38] sm:$0xff]
    %v614 = vld [vmem:[%s605 + $0x40] sm:$0xff]
    %v615 = vld [vmem:[%s605 + $0x48] sm:$0xff]
    %v616 = vld [vmem:[%s605 + $0x50] sm:$0xff]
    %v617 = vld [vmem:[%s605 + $0x58] sm:$0xff]
    %v618 = vld [vmem:[%s605 + $0x60] sm:$0xff]
    %v619 = vld [vmem:[%s605 + $0x68] sm:$0xff]
    %v620 = vld [vmem:[%s605 + $0x70] sm:$0xff]
    %v621 = vld [vmem:[%s605 + $0x78] sm:$0xff]
    %v622 = vld [vmem:[%s605 + $0x80] sm:$0xff]
    %v623 = vld [vmem:[%s605 + $0x88] sm:$0xff]
    %v624 = vld [vmem:[%s605 + $0x90] sm:$0xff]
    %v625 = vld [vmem:[%s605 + $0x98] sm:$0xff]
    %v626 = vld [vmem:[%s605 + $0xa0] sm:$0xff]
    %v627 = vld [vmem:[%s605 + $0xa8] sm:$0xff]
    %v628 = vld [vmem:[%s605 + $0xb0] sm:$0xff]
    %v629 = vld [vmem:[%s605 + $0xb8] sm:$0xff]
    %v630 = vld [vmem:[%s605 + $0xc0] sm:$0xff]
    %v631 = vld [vmem:[%s605 + $0xc8] sm:$0xff]
    %v632 = vld [vmem:[%s605 + $0xd0] sm:$0xff]
    %v633 = vld [vmem:[%s605 + $0xd8] sm:$0xff]
    %v634 = vld [vmem:[%s605 + $0xe0] sm:$0xff]
    %v635 = vld [vmem:[%s605 + $0xe8] sm:$0xff]
    %v636 = vld [vmem:[%s605 + $0xf0] sm:$0xff]
    %v637 = vld [vmem:[%s605 + $0xf8] sm:$0xff]
    %s638 = scalar_lea.vmem %s5, 2
    %v639 = vld [vmem:[%s638] sm:$0x3]
    %v641 = vlaneseq
    %v642 = vshrl.u32 %v641, 7
    %v643 = vsub.s32 0, %v642
    %v644 = vrot.slane %v639, %v643
    %v645 = vlaneseq
    %v646 = vshrl.u32 %v645, 7
    %v647 = vsub.s32 1, %v646
    %v648 = vrot.slane %v639, %v647
    %v652 = vunpack.c.l.b16 %v604
    %v653 = vunpack.c.h.b16 %v604
    %v654 = vpack.c.b16 %v652, %v652
    %v655 = vpack.c.b16 %v653, %v653
    %v690 = vunpack.c.l.b16 %v606
    %v691 = vunpack.c.h.b16 %v606
    %v692 = vunpack.c.l.b16 %v607
    %v693 = vunpack.c.h.b16 %v607
    %v694 = vunpack.c.l.b16 %v608
    %v695 = vunpack.c.h.b16 %v608
    %v696 = vunpack.c.l.b16 %v609
    %v697 = vunpack.c.h.b16 %v609
    %v698 = vunpack.c.l.b16 %v610
    %v699 = vunpack.c.h.b16 %v610
    %v700 = vunpack.c.l.b16 %v611
    %v701 = vunpack.c.h.b16 %v611
    %v702 = vunpack.c.l.b16 %v612
    %v703 = vunpack.c.h.b16 %v612
    %v704 = vunpack.c.l.b16 %v613
    %v705 = vunpack.c.h.b16 %v613
    %v706 = vunpack.c.l.b16 %v614
    %v707 = vunpack.c.h.b16 %v614
    %v708 = vunpack.c.l.b16 %v615
    %v709 = vunpack.c.h.b16 %v615
    %v710 = vunpack.c.l.b16 %v616
    %v711 = vunpack.c.h.b16 %v616
    %v712 = vunpack.c.l.b16 %v617
    %v713 = vunpack.c.h.b16 %v617
    %v714 = vunpack.c.l.b16 %v618
    %v715 = vunpack.c.h.b16 %v618
    %v716 = vunpack.c.l.b16 %v619
    %v717 = vunpack.c.h.b16 %v619
    %v718 = vunpack.c.l.b16 %v620
    %v719 = vunpack.c.h.b16 %v620
    %v720 = vunpack.c.l.b16 %v621
    %v721 = vunpack.c.h.b16 %v621
    %v722 = vunpack.c.l.b16 %v622
    %v723 = vunpack.c.h.b16 %v622
    %v724 = vunpack.c.l.b16 %v623
    %v725 = vunpack.c.h.b16 %v623
    %v726 = vunpack.c.l.b16 %v624
    %v727 = vunpack.c.h.b16 %v624
    %v728 = vunpack.c.l.b16 %v625
    %v729 = vunpack.c.h.b16 %v625
    %v730 = vunpack.c.l.b16 %v626
    %v731 = vunpack.c.h.b16 %v626
    %v732 = vunpack.c.l.b16 %v627
    %v733 = vunpack.c.h.b16 %v627
    %v734 = vunpack.c.l.b16 %v628
    %v735 = vunpack.c.h.b16 %v628
    %v736 = vunpack.c.l.b16 %v629
    %v737 = vunpack.c.h.b16 %v629
    %v738 = vunpack.c.l.b16 %v630
    %v739 = vunpack.c.h.b16 %v630
    %v740 = vunpack.c.l.b16 %v631
    %v741 = vunpack.c.h.b16 %v631
    %v742 = vunpack.c.l.b16 %v632
    %v743 = vunpack.c.h.b16 %v632
    %v744 = vunpack.c.l.b16 %v633
    %v745 = vunpack.c.h.b16 %v633
    %v746 = vunpack.c.l.b16 %v634
    %v747 = vunpack.c.h.b16 %v634
    %v748 = vunpack.c.l.b16 %v635
    %v749 = vunpack.c.h.b16 %v635
    %v750 = vunpack.c.l.b16 %v636
    %v751 = vunpack.c.h.b16 %v636
    %v752 = vunpack.c.l.b16 %v637
    %v753 = vunpack.c.h.b16 %v637
    %v754 = vpack.c.b16 %v692, %v690
    %v755 = vpack.c.b16 %v693, %v691
    %v756 = vpack.c.b16 %v696, %v694
    %v757 = vpack.c.b16 %v697, %v695
    %v758 = vpack.c.b16 %v700, %v698
    %v759 = vpack.c.b16 %v701, %v699
    %v760 = vpack.c.b16 %v704, %v702
    %v761 = vpack.c.b16 %v705, %v703
    %v762 = vpack.c.b16 %v708, %v706
    %v763 = vpack.c.b16 %v709, %v707
    %v764 = vpack.c.b16 %v712, %v710
    %v765 = vpack.c.b16 %v713, %v711
    %v766 = vpack.c.b16 %v716, %v714
    %v767 = vpack.c.b16 %v717, %v715
    %v768 = vpack.c.b16 %v720, %v718
    %v769 = vpack.c.b16 %v721, %v719
    %v770 = vpack.c.b16 %v724, %v722
    %v771 = vpack.c.b16 %v725, %v723
    %v772 = vpack.c.b16 %v728, %v726
    %v773 = vpack.c.b16 %v729, %v727
    %v774 = vpack.c.b16 %v732, %v730
    %v775 = vpack.c.b16 %v733, %v731
    %v776 = vpack.c.b16 %v736, %v734
    %v777 = vpack.c.b16 %v737, %v735
    %v778 = vpack.c.b16 %v740, %v738
    %v779 = vpack.c.b16 %v741, %v739
    %v780 = vpack.c.b16 %v744, %v742
    %v781 = vpack.c.b16 %v745, %v743
    %v782 = vpack.c.b16 %v748, %v746
    %v783 = vpack.c.b16 %v749, %v747
    %v784 = vpack.c.b16 %v752, %v750
    %v785 = vpack.c.b16 %v753, %v751
    %818 = vmatprep.subr.bf16.mxu0 %v755
    %819 = vmatpush1.bf16.msra.mxu0 %v754
    %820 = vmatprep.subr.bf16.mxu0 %v757
    %821 = vmatpush1.bf16.msra.mxu0 %v756
    %822 = vmatprep.subr.bf16.mxu0 %v759
    %823 = vmatpush1.bf16.msra.mxu0 %v758
    %824 = vmatprep.subr.bf16.mxu0 %v761
    %825 = vmatpush1.bf16.msra.mxu0 %v760
    %826 = vmatprep.subr.bf16.mxu0 %v763
    %827 = vmatpush1.bf16.msra.mxu0 %v762
    %828 = vmatprep.subr.bf16.mxu0 %v765
    %829 = vmatpush1.bf16.msra.mxu0 %v764
    %830 = vmatprep.subr.bf16.mxu0 %v767
    %831 = vmatpush1.bf16.msra.mxu0 %v766
    %832 = vmatprep.subr.bf16.mxu0 %v769
    %833 = vmatpush1.bf16.msra.mxu0 %v768
    %834 = vmatprep.subr.bf16.mxu0 %v771
    %835 = vmatpush1.bf16.msra.mxu0 %v770
    %836 = vmatprep.subr.bf16.mxu0 %v773
    %837 = vmatpush1.bf16.msra.mxu0 %v772
    %838 = vmatprep.subr.bf16.mxu0 %v775
    %839 = vmatpush1.bf16.msra.mxu0 %v774
    %840 = vmatprep.subr.bf16.mxu0 %v777
    %841 = vmatpush1.bf16.msra.mxu0 %v776
    %842 = vmatprep.subr.bf16.mxu0 %v779
    %843 = vmatpush1.bf16.msra.mxu0 %v778
    %844 = vmatprep.subr.bf16.mxu0 %v781
    %845 = vmatpush1.bf16.msra.mxu0 %v780
    %846 = vmatprep.subr.bf16.mxu0 %v783
    %847 = vmatpush1.bf16.msra.mxu0 %v782
    %848 = vmatprep.subr.bf16.mxu0 %v785
    %849 = vmatpush1.bf16.msra.mxu0 %v784
    %850 = vmatprep.mubr.bf16.mxu0 %v655
    %851 = vmatmul.mubr.bf16.gmra.mrb[0].mxu0 %v654
    %v852 = vpop.f32.mrb[0].mxu0
    %v853 = vadd.f32 %v644, %v852
    %v854 = vpop.f32.mrb[0].mxu0
    %v855 = vadd.f32 %v648, %v854
    %v856 = vpop.f32.mrb[0].mxu0
    %v857 = vpop.f32.mrb[0].mxu0
    %858 = vdwg.mxu0
    %s859 = scalar_lea.vmem [#allocation9], 64
    %v860 = vld [vmem:[%s859] sm:$0xf]
    %v861 = vld [vmem:[%s859 + $0x4] sm:$0xf]
    %v862 = vld [vmem:[%s859 + $0x8] sm:$0xf]
    %v863 = vld [vmem:[%s859 + $0xc] sm:$0xf]
    %v864 = vld [vmem:[%s859 + $0x10] sm:$0xf]
    %v865 = vld [vmem:[%s859 + $0x14] sm:$0xf]
    %v866 = vld [vmem:[%s859 + $0x18] sm:$0xf]
    %v867 = vld [vmem:[%s859 + $0x1c] sm:$0xf]
    %v868 = vld [vmem:[%s859 + $0x20] sm:$0xf]
    %v869 = vld [vmem:[%s859 + $0x24] sm:$0xf]
    %v870 = vld [vmem:[%s859 + $0x28] sm:$0xf]
    %v871 = vld [vmem:[%s859 + $0x2c] sm:$0xf]
    %v872 = vld [vmem:[%s859 + $0x30] sm:$0xf]
    %v873 = vld [vmem:[%s859 + $0x34] sm:$0xf]
    %v874 = vld [vmem:[%s859 + $0x38] sm:$0xf]
    %v875 = vld [vmem:[%s859 + $0x3c] sm:$0xf]
    %s876 = scalar_lea.vmem %s6, 1
    %v877 = vld [vmem:[%s876] sm:$0x1]
    %v879 = vlaneseq
    %v880 = vshrl.u32 %v879, 7
    %v881 = vsub.s32 0, %v880
    %v882 = vrot.slane %v877, %v881
    %v900 = vunpack.c.l.b16 %v860
    %v901 = vunpack.c.l.b16 %v861
    %v902 = vunpack.c.l.b16 %v862
    %v903 = vunpack.c.l.b16 %v863
    %v904 = vunpack.c.l.b16 %v864
    %v905 = vunpack.c.l.b16 %v865
    %v906 = vunpack.c.l.b16 %v866
    %v907 = vunpack.c.l.b16 %v867
    %v908 = vunpack.c.l.b16 %v868
    %v909 = vunpack.c.l.b16 %v869
    %v910 = vunpack.c.l.b16 %v870
    %v911 = vunpack.c.l.b16 %v871
    %v912 = vunpack.c.l.b16 %v872
    %v913 = vunpack.c.l.b16 %v873
    %v914 = vunpack.c.l.b16 %v874
    %v915 = vunpack.c.l.b16 %v875
    %v916 = vpack.c.b16 %v901, %v900
    %v917 = vpack.c.b16 %v903, %v902
    %v918 = vpack.c.b16 %v905, %v904
    %v919 = vpack.c.b16 %v907, %v906
    %v920 = vpack.c.b16 %v909, %v908
    %v921 = vpack.c.b16 %v911, %v910
    %v922 = vpack.c.b16 %v913, %v912
    %v923 = vpack.c.b16 %v915, %v914
    %932 = vmatprep.subr.bf16.mxu0 0
    %933 = vmatpush1.bf16.msra.mxu0 %v916
    %934 = vmatprep.subr.bf16.mxu0 0
    %935 = vmatpush1.bf16.msra.mxu0 %v917
    %936 = vmatprep.subr.bf16.mxu0 0
    %937 = vmatpush1.bf16.msra.mxu0 %v918
    %938 = vmatprep.subr.bf16.mxu0 0
    %939 = vmatpush1.bf16.msra.mxu0 %v919
    %940 = vmatprep.subr.bf16.mxu0 0
    %941 = vmatpush1.bf16.msra.mxu0 %v920
    %942 = vmatprep.subr.bf16.mxu0 0
    %943 = vmatpush1.bf16.msra.mxu0 %v921
    %944 = vmatprep.subr.bf16.mxu0 0
    %945 = vmatpush1.bf16.msra.mxu0 %v922
    %946 = vmatprep.subr.bf16.mxu0 0
    %947 = vmatpush1.bf16.msra.mxu0 %v923
    %948 = vmatprep.subr.bf16.mxu0 0
    %949 = vmatpush1.bf16.msra.mxu0 0
    %950 = vmatprep.subr.bf16.mxu0 0
    %951 = vmatpush1.bf16.msra.mxu0 0
    %952 = vmatprep.subr.bf16.mxu0 0
    %953 = vmatpush1.bf16.msra.mxu0 0
    %954 = vmatprep.subr.bf16.mxu0 0
    %955 = vmatpush1.bf16.msra.mxu0 0
    %956 = vmatprep.subr.bf16.mxu0 0
    %957 = vmatpush1.bf16.msra.mxu0 0
    %958 = vmatprep.subr.bf16.mxu0 0
    %959 = vmatpush1.bf16.msra.mxu0 0
    %960 = vmatprep.subr.bf16.mxu0 0
    %961 = vmatpush1.bf16.msra.mxu0 0
    %962 = vmatprep.subr.bf16.mxu0 0
    %963 = vmatpush1.bf16.msra.mxu0 0
    %964 = vmatprep.mubr.bf16.mxu0 0
    %965 = vmatmul.mubr.bf16.gmra.mrb[0].mxu0 %v604
    %v966 = vpop.f32.mrb[0].mxu0
    %v967 = vadd.f32 %v882, %v966
    %v968 = vpop.f32.mrb[0].mxu0
    %v969 = vpop.f32.mrb[0].mxu0
    %v970 = vpop.f32.mrb[0].mxu0
    %971 = vdwg.mxu0
    %s972 = scalar_lea.vmem [#allocation11], 64
    %v973 = vld [vmem:[%s972] sm:$0xf]
    %v974 = vld [vmem:[%s972 + $0x4] sm:$0xf]
    %v975 = vld [vmem:[%s972 + $0x8] sm:$0xf]
    %v976 = vld [vmem:[%s972 + $0xc] sm:$0xf]
    %v977 = vld [vmem:[%s972 + $0x10] sm:$0xf]
    %v978 = vld [vmem:[%s972 + $0x14] sm:$0xf]
    %v979 = vld [vmem:[%s972 + $0x18] sm:$0xf]
    %v980 = vld [vmem:[%s972 + $0x1c] sm:$0xf]
    %v981 = vld [vmem:[%s972 + $0x20] sm:$0xf]
    %v982 = vld [vmem:[%s972 + $0x24] sm:$0xf]
    %v983 = vld [vmem:[%s972 + $0x28] sm:$0xf]
    %v984 = vld [vmem:[%s972 + $0x2c] sm:$0xf]
    %v985 = vld [vmem:[%s972 + $0x30] sm:$0xf]
    %v986 = vld [vmem:[%s972 + $0x34] sm:$0xf]
    %v987 = vld [vmem:[%s972 + $0x38] sm:$0xf]
    %v988 = vld [vmem:[%s972 + $0x3c] sm:$0xf]
    %s989 = scalar_lea.vmem %s7, 1
    %v990 = vld [vmem:[%s989] sm:$0x1]
    %v992 = vlaneseq
    %v993 = vshrl.u32 %v992, 7
    %v994 = vsub.s32 0, %v993
    %v995 = vrot.slane %v990, %v994
    %v1013 = vunpack.c.l.b16 %v973
    %v1014 = vunpack.c.l.b16 %v974
    %v1015 = vunpack.c.l.b16 %v975
    %v1016 = vunpack.c.l.b16 %v976
    %v1017 = vunpack.c.l.b16 %v977
    %v1018 = vunpack.c.l.b16 %v978
    %v1019 = vunpack.c.l.b16 %v979
    %v1020 = vunpack.c.l.b16 %v980
    %v1021 = vunpack.c.l.b16 %v981
    %v1022 = vunpack.c.l.b16 %v982
    %v1023 = vunpack.c.l.b16 %v983
    %v1024 = vunpack.c.l.b16 %v984
    %v1025 = vunpack.c.l.b16 %v985
    %v1026 = vunpack.c.l.b16 %v986
    %v1027 = vunpack.c.l.b16 %v987
    %v1028 = vunpack.c.l.b16 %v988
    %v1029 = vpack.c.b16 %v1014, %v1013
    %v1030 = vpack.c.b16 %v1016, %v1015
    %v1031 = vpack.c.b16 %v1018, %v1017
    %v1032 = vpack.c.b16 %v1020, %v1019
    %v1033 = vpack.c.b16 %v1022, %v1021
    %v1034 = vpack.c.b16 %v1024, %v1023
    %v1035 = vpack.c.b16 %v1026, %v1025
    %v1036 = vpack.c.b16 %v1028, %v1027
    %1045 = vmatprep.subr.bf16.mxu0 0
    %1046 = vmatpush1.bf16.msra.mxu0 %v1029
    %1047 = vmatprep.subr.bf16.mxu0 0
    %1048 = vmatpush1.bf16.msra.mxu0 %v1030
    %1049 = vmatprep.subr.bf16.mxu0 0
    %1050 = vmatpush1.bf16.msra.mxu0 %v1031
    %1051 = vmatprep.subr.bf16.mxu0 0
    %1052 = vmatpush1.bf16.msra.mxu0 %v1032
    %1053 = vmatprep.subr.bf16.mxu0 0
    %1054 = vmatpush1.bf16.msra.mxu0 %v1033
    %1055 = vmatprep.subr.bf16.mxu0 0
    %1056 = vmatpush1.bf16.msra.mxu0 %v1034
    %1057 = vmatprep.subr.bf16.mxu0 0
    %1058 = vmatpush1.bf16.msra.mxu0 %v1035
    %1059 = vmatprep.subr.bf16.mxu0 0
    %1060 = vmatpush1.bf16.msra.mxu0 %v1036
    %1061 = vmatprep.subr.bf16.mxu0 0
    %1062 = vmatpush1.bf16.msra.mxu0 0
    %1063 = vmatprep.subr.bf16.mxu0 0
    %1064 = vmatpush1.bf16.msra.mxu0 0
    %1065 = vmatprep.subr.bf16.mxu0 0
    %1066 = vmatpush1.bf16.msra.mxu0 0
    %1067 = vmatprep.subr.bf16.mxu0 0
    %1068 = vmatpush1.bf16.msra.mxu0 0
    %1069 = vmatprep.subr.bf16.mxu0 0
    %1070 = vmatpush1.bf16.msra.mxu0 0
    %1071 = vmatprep.subr.bf16.mxu0 0
    %1072 = vmatpush1.bf16.msra.mxu0 0
    %1073 = vmatprep.subr.bf16.mxu0 0
    %1074 = vmatpush1.bf16.msra.mxu0 0
    %1075 = vmatprep.subr.bf16.mxu0 0
    %1076 = vmatpush1.bf16.msra.mxu0 0
    %1077 = vmatprep.mubr.bf16.mxu0 0
    %1078 = vmatmul.mubr.bf16.gmra.mrb[0].mxu0 %v655
    %v1079 = vpop.f32.mrb[0].mxu0
    %v1080 = vadd.f32 %v995, %v1079
    %v1081 = vpop.f32.mrb[0].mxu0
    %v1082 = vpop.f32.mrb[0].mxu0
    %v1083 = vpop.f32.mrb[0].mxu0
    %1084 = vdwg.mxu0
    %v1085 = vxor.u32 %v853, 2147483648
    %v1086 = vmul.f32 %v1085, 1.442695
    %v1087 = vpow.pop %v1086
    %v1088 = vadd.f32 %v1087, 1.0
    %v1089 = vrcp.pop %v1088
    %v1090 = vmul.f32 1.0, %v1089
    %v1091 = vxor.u32 %v855, 2147483648
    %v1092 = vmul.f32 %v1091, 1.442695
    %v1093 = vpow.pop %v1092
    %v1094 = vadd.f32 %v1093, 1.0
    %v1095 = vrcp.pop %v1094
    %v1096 = vmul.f32 1.0, %v1095
    %v1097 = vmul.f32 %v1090, %v1080
    %v1098 = vadd.f32 %v967, %v1097
    %v1099 = vtanh.pop %v1098
    %v1100 = vsub.f32 1.0, %v1096
    %v1101 = vmul.f32 %v1100, %v1099
    %v1102 = vmul.f32 %v1096, %v601
    %v1103 = vadd.f32 %v1101, %v1102
    %s1104 = scalar_lea.vmem [#allocation12], 8
    %1105 = vst [vmem:[%s1104] sm:$0xff] %v1103
    // Predicated region
    $region54: #{tpu_custom_call.1} parent=1 // pred_check
      _
    $region55: #{tpu_custom_call.1} parent=1 // pred_check_branch
      %1107 = sbr.rel (0) target = $region57
    $region56: #{tpu_custom_call.1} parent=1 // pred_region
      %s1109 = ssub.s32 256, 256
      %1110 = vsyncadd [#allocation5], %s1109
      %s1111 = sshll.u32 [#allocation12], 4
      %s1112 = int_to_ptr.vmem [resolvable:$true] %s1111
      %1117 = dma.vmem_to_hbm [thread:$0]  %s1112, 256, %s8, [#allocation5], 128, 128, 8
    $region57: #{tpu_custom_call.1} parent=1 // pred_fallthru
      _
    // Predicated region
    $region58: #{tpu_custom_call.1} parent=1 // pred_check
      _
    $region59: #{tpu_custom_call.1} parent=1 // pred_check_branch
      %1119 = sbr.rel (0) target = $region61
    $region60: #{tpu_custom_call.1} parent=1 // pred_region
      %1120 = dma.done [#allocation5], 256
    $region61: #{tpu_custom_call.1} parent=1 // pred_fallthru
      _
    %1121 = vsyncpa [#allocation4], 1
    %1122 = vsyncpa [#allocation7], 1
    %1123 = vsyncpa [#allocation10], 1
    %1124 = vsyncpa [#allocation5], 1

</llo_original>
